<compile_context>
chip_gen: v7x
topology: tpu7x:2x2x1
jax: 0.10.0
libtpu: 0.0.40
codegen_flags: <defaults>
</compile_context>

<pallas_src>
import jax
import jax.numpy as jnp
import numpy as np
from jax.experimental import pallas as pl
from jax.experimental.pallas import tpu as pltpu


def _pair(v):
    if isinstance(v, (tuple, list)):
        assert len(v) == 2, "this port supports 2 kernel (spatial) dims"
        return (int(v[0]), int(v[1]))
    return (int(v), int(v))


def _round_up(x, m):
    return -(-x // m) * m


def _pick_batch_tile(B, H, W, pH, pW, kH, kW, oH, oW, itemsize,
                     budget_bytes=10 * 1024 * 1024, min_grid=4):
    """Largest divisor Bt of B whose double-buffered working set fits the VMEM
    budget, while keeping >= min_grid grid steps when possible (so the single
    'parallel' axis can still shard across the 2 TensorCores on v7x)."""
    per_b_in = _round_up(H, 8) * _round_up(W, 128) * itemsize
    per_b_scr = _round_up(pH, 8) * _round_up(pW, 128) * itemsize
    per_b_out = kH * kW * _round_up(oH, 8) * _round_up(oW, 128) * itemsize
    per_b = 2 * per_b_in + per_b_scr + 2 * per_b_out  # in/out double-buffered
    cap = max(1, budget_bytes // per_b)
    if B >= min_grid:
        cap = min(cap, B // min_grid)
    cap = min(cap, B)
    bt = 1
    for d in range(1, int(cap) + 1):
        if B % d == 0:
            bt = d
    return bt


# ---------------------------------------------------------------------------
# Pallas kernel factory.  One grid step = one tile of Bt batch elements.
#   out[b, ky, kx, oy, ox] = padded[b, ky*dH + oy*sH, kx*dW + ox*sW]
# Padding is done in-kernel (VMEM scratch) so no XLA jnp.pad pre-pass is needed.
# ---------------------------------------------------------------------------
def _make_unfold_kernel(Bt, H, W, padH, padW, kH, kW, oH, oW, sH, sW, dH, dW, dtype):
    pH, pW = H + 2 * padH, W + 2 * padW
    sh = None if sH == 1 else sH
    sw = None if sW == 1 else sW

    def extract(src_ref, o_ref):
        # unrolled over the small, static kernel extent: one window read +
        # store per kernel element, all VMEM-resident.
        for ky in range(kH):
            for kx in range(kW):
                o_ref[:, ky, kx, :, :] = src_ref[
                    :,
                    pl.ds(ky * dH, oH, stride=sh),
                    pl.ds(kx * dW, oW, stride=sw),
                ]

    if padH == 0 and padW == 0:
        def kernel(x_ref, o_ref):
            extract(x_ref, o_ref)

        scratch = []
    else:
        def kernel(x_ref, o_ref, pad_ref):
            # in-kernel zero padding (replaces the jnp.pad HBM round trip).
            # Re-zeroed every step: cheap VMEM work, and safe under megacore
            # grid sharding (each core owns its own scratch).
            pad_ref[...] = jnp.zeros_like(pad_ref)
            pad_ref[:, pl.ds(padH, H), pl.ds(padW, W)] = x_ref[...]
            extract(pad_ref, o_ref)

        scratch = [pltpu.VMEM((Bt, pH, pW), dtype)]
    return kernel, scratch


def unfold2d(x, kernel_size, padding, stride, dilation=(1, 1)):
    kH, kW = kernel_size
    padH, padW = padding
    sH, sW = stride
    dH, dW = dilation

    *batch, H, W = x.shape
    B = int(np.prod(batch)) if batch else 1
    pH, pW = H + 2 * padH, W + 2 * padW
    oH = (pH - dH * (kH - 1) - 1) // sH + 1
    oW = (pW - dW * (kW - 1) - 1) // sW + 1
    if oH <= 0 or oW <= 0:
        raise ValueError("kernel does not fit in (padded) input")

    # glue: collapse batch dims only (padding handled inside the kernel).
    xr = x.reshape(B, H, W)
    Bt = _pick_batch_tile(B, H, W, pH, pW, kH, kW, oH, oW, np.dtype(x.dtype).itemsize)
    kernel, scratch = _make_unfold_kernel(
        Bt, H, W, padH, padW, kH, kW, oH, oW, sH, sW, dH, dW, x.dtype
    )

    out5 = pl.pallas_call(
        kernel,
        out_shape=jax.ShapeDtypeStruct((B, kH, kW, oH, oW), x.dtype),
        grid=(B // Bt,),
        in_specs=[pl.BlockSpec((Bt, H, W), lambda b: (b, 0, 0))],
        out_specs=pl.BlockSpec((Bt, kH, kW, oH, oW), lambda b: (b, 0, 0, 0, 0)),
        scratch_shapes=scratch,
        compiler_params=pltpu.CompilerParams(
            dimension_semantics=("parallel",),
            vmem_limit_bytes=32 * 1024 * 1024,
        ),
    )(xr)

    # glue: restore batch dims and permute to (*batch, oH, oW, kH, kW).
    # TODO(synk): the final permute is delegated to XLA; emitting the
    # (oH, oW, kH, kW) layout directly from the kernel would require
    # lane-interleaved (stride kH*kW) stores, which is not worth the lowering
    # risk for the tiny kernel-dims tail.
    out = out5.reshape(*batch, kH, kW, oH, oW)
    nb = len(batch)
    perm = tuple(range(nb)) + (nb + 2, nb + 3, nb, nb + 1)
    return jnp.transpose(out, perm)


class Unfold:
    """JAX/Pallas port of the n-D Unfold module, specialized to 2 kernel dims."""

    def __init__(self, kernel_size, dilation=1, padding=0, stride=1, input_size=None):
        self.kernel_size = _pair(kernel_size)
        self.dilation = _pair(dilation)
        self.padding = _pair(padding)
        self.stride = _pair(stride)
        if any(d != 1 for d in self.dilation):
            # TODO(synk): dilation > 1 in the reference module yields dilated-size
            # kernel dims with modular-wraparound index scrambling (an artifact of
            # its mask construction); that behavior is not replicated here.
            raise NotImplementedError("dilation != 1 not supported in this port")
        self.input_size = _pair(input_size) if input_size is not None else None

    def __call__(self, x):
        if self.input_size is not None:
            if tuple(x.shape[-2:]) != self.input_size:
                raise ValueError(
                    f"Input tensor does not match previously defined size. "
                    f"Got {tuple(x.shape[-2:])}, expected {self.input_size}."
                )
        return unfold2d(x, self.kernel_size, self.padding, self.stride, self.dilation)


# ---------------------------------------------------------------------------
# pure-JAX reference (same semantics as the PyTorch module with dilation=1)
# ---------------------------------------------------------------------------
def unfold_ref(x, kernel_size, padding, stride):
    kH, kW = kernel_size
    padH, padW = padding
    sH, sW = stride
    *batch, H, W = x.shape
    xp = jnp.pad(x, [(0, 0)] * len(batch) + [(padH, padH), (padW, padW)])
    pH, pW = H + 2 * padH, W + 2 * padW
    oH = (pH - kH) // sH + 1
    oW = (pW - kW) // sW + 1
    out = jnp.zeros((*batch, oH, oW, kH, kW), x.dtype)
    for ky in range(kH):
        for kx in range(kW):
            win = xp[..., ky: ky + (oH - 1) * sH + 1: sH, kx: kx + (oW - 1) * sW + 1: sW]
            out = out.at[..., ky, kx].set(win)
    return out


if __name__ == "__main__":
    key = jax.random.PRNGKey(0)
    N, C, H, W = 2, 4, 16, 16
    x = jax.random.normal(key, (N, C, H, W), dtype=jnp.float32)

    module = Unfold(kernel_size=3, dilation=1, padding=1, stride=1, input_size=(H, W))
    out = module(x)
    out = jax.block_until_ready(out)

    expected = unfold_ref(x, module.kernel_size, module.padding, module.stride)
    assert out.shape == (N, C, 16, 16, 3, 3), out.shape
    assert out.dtype == x.dtype
    np.testing.assert_allclose(np.asarray(out), np.asarray(expected), rtol=0, atol=0)

    # second case: no padding path (kernel variant without the VMEM scratch)
    module2 = Unfold(kernel_size=(3, 3), dilation=1, padding=0, stride=1)
    out2 = jax.block_until_ready(module2(x))
    expected2 = unfold_ref(x, module2.kernel_size, module2.padding, module2.stride)
    assert out2.shape == (N, C, 14, 14, 3, 3), out2.shape
    np.testing.assert_allclose(np.asarray(out2), np.asarray(expected2), rtol=0, atol=0)

    print("KERNEL_OK")
</pallas_src>

<mosaic_0001>
module attributes {stable_mosaic.version = 11 : i64} {
  func.func @kernel(%arg0: i32, %arg1: memref<2x16x16xf32, #tpu.memory_space<vmem>>, %arg2: memref<2x3x3x16x16xf32, #tpu.memory_space<vmem>>, %arg3: memref<2x18x18xf32, #tpu.memory_space<vmem>>) attributes {dimension_semantics = [#tpu.dimension_semantics<parallel>], iteration_bounds = array<i64: 4>, scalar_prefetch = 0 : i64, scratch_operands = 1 : i64, tpu.core_type = #tpu.core_type<tc>, window_params = [{transform_indices = @transform_0, window_bounds = array<i64: 2, 16, 16>}, {transform_indices = @transform_1, window_bounds = array<i64: 2, 3, 3, 16, 16>}]} {
    %cst = arith.constant 0.000000e+00 : f32
    %0 = vector.broadcast %cst : f32 to vector<2x18x18xf32>
    %c0 = arith.constant 0 : index
    %c0_0 = arith.constant 0 : index
    %c0_1 = arith.constant 0 : index
    %1 = vector.load %arg3[%c0, %c0_0, %c0_1] : memref<2x18x18xf32, #tpu.memory_space<vmem>>, vector<2x18x18xf32>
    tpu.vector_store %arg3[%c0, %c0_0, %c0_1], %0 {strides = array<i32>} : memref<2x18x18xf32, #tpu.memory_space<vmem>>, vector<2x18x18xf32>,
    %c0_2 = arith.constant 0 : index
    %c0_3 = arith.constant 0 : index
    %c0_4 = arith.constant 0 : index
    %2 = vector.load %arg1[%c0_2, %c0_3, %c0_4] : memref<2x16x16xf32, #tpu.memory_space<vmem>>, vector<2x16x16xf32>
    %c0_5 = arith.constant 0 : index
    %c1 = arith.constant 1 : index
    %c1_6 = arith.constant 1 : index
    %3 = vector.load %arg3[%c0_5, %c1, %c1_6] : memref<2x18x18xf32, #tpu.memory_space<vmem>>, vector<2x16x16xf32>
    tpu.vector_store %arg3[%c0_5, %c1, %c1_6], %2 {strides = array<i32>} : memref<2x18x18xf32, #tpu.memory_space<vmem>>, vector<2x16x16xf32>,
    %c0_7 = arith.constant 0 : index
    %c0_8 = arith.constant 0 : index
    %c0_9 = arith.constant 0 : index
    %4 = vector.load %arg3[%c0_7, %c0_8, %c0_9] : memref<2x18x18xf32, #tpu.memory_space<vmem>>, vector<2x16x16xf32>
    %c0_10 = arith.constant 0 : index
    %c0_11 = arith.constant 0 : index
    %c0_12 = arith.constant 0 : index
    %c0_13 = arith.constant 0 : index
    %c0_14 = arith.constant 0 : index
    %5 = vector.load %arg2[%c0_10, %c0_11, %c0_12, %c0_13, %c0_14] : memref<2x3x3x16x16xf32, #tpu.memory_space<vmem>>, vector<2x1x1x16x16xf32>
    %6 = vector.shape_cast %5 : vector<2x1x1x16x16xf32> to vector<2x16x16xf32>
    %7 = vector.shape_cast %4 : vector<2x16x16xf32> to vector<2x1x1x16x16xf32>
    tpu.vector_store %arg2[%c0_10, %c0_11, %c0_12, %c0_13, %c0_14], %7 {strides = array<i32>} : memref<2x3x3x16x16xf32, #tpu.memory_space<vmem>>, vector<2x1x1x16x16xf32>,
    %c0_15 = arith.constant 0 : index
    %c0_16 = arith.constant 0 : index
    %c1_17 = arith.constant 1 : index
    %8 = vector.load %arg3[%c0_15, %c0_16, %c1_17] : memref<2x18x18xf32, #tpu.memory_space<vmem>>, vector<2x16x16xf32>
    %c0_18 = arith.constant 0 : index
    %c0_19 = arith.constant 0 : index
    %c1_20 = arith.constant 1 : index
    %c0_21 = arith.constant 0 : index
    %c0_22 = arith.constant 0 : index
    %9 = vector.load %arg2[%c0_18, %c0_19, %c1_20, %c0_21, %c0_22] : memref<2x3x3x16x16xf32, #tpu.memory_space<vmem>>, vector<2x1x1x16x16xf32>
    %10 = vector.shape_cast %9 : vector<2x1x1x16x16xf32> to vector<2x16x16xf32>
    %11 = vector.shape_cast %8 : vector<2x16x16xf32> to vector<2x1x1x16x16xf32>
    tpu.vector_store %arg2[%c0_18, %c0_19, %c1_20, %c0_21, %c0_22], %11 {strides = array<i32>} : memref<2x3x3x16x16xf32, #tpu.memory_space<vmem>>, vector<2x1x1x16x16xf32>,
    %c0_23 = arith.constant 0 : index
    %c0_24 = arith.constant 0 : index
    %c2 = arith.constant 2 : index
    %12 = vector.load %arg3[%c0_23, %c0_24, %c2] : memref<2x18x18xf32, #tpu.memory_space<vmem>>, vector<2x16x16xf32>
    %c0_25 = arith.constant 0 : index
    %c0_26 = arith.constant 0 : index
    %c2_27 = arith.constant 2 : index
    %c0_28 = arith.constant 0 : index
    %c0_29 = arith.constant 0 : index
    %13 = vector.load %arg2[%c0_25, %c0_26, %c2_27, %c0_28, %c0_29] : memref<2x3x3x16x16xf32, #tpu.memory_space<vmem>>, vector<2x1x1x16x16xf32>
    %14 = vector.shape_cast %13 : vector<2x1x1x16x16xf32> to vector<2x16x16xf32>
    %15 = vector.shape_cast %12 : vector<2x16x16xf32> to vector<2x1x1x16x16xf32>
    tpu.vector_store %arg2[%c0_25, %c0_26, %c2_27, %c0_28, %c0_29], %15 {strides = array<i32>} : memref<2x3x3x16x16xf32, #tpu.memory_space<vmem>>, vector<2x1x1x16x16xf32>,
    %c0_30 = arith.constant 0 : index
    %c1_31 = arith.constant 1 : index
    %c0_32 = arith.constant 0 : index
    %16 = vector.load %arg3[%c0_30, %c1_31, %c0_32] : memref<2x18x18xf32, #tpu.memory_space<vmem>>, vector<2x16x16xf32>
    %c0_33 = arith.constant 0 : index
    %c1_34 = arith.constant 1 : index
    %c0_35 = arith.constant 0 : index
    %c0_36 = arith.constant 0 : index
    %c0_37 = arith.constant 0 : index
    %17 = vector.load %arg2[%c0_33, %c1_34, %c0_35, %c0_36, %c0_37] : memref<2x3x3x16x16xf32, #tpu.memory_space<vmem>>, vector<2x1x1x16x16xf32>
    %18 = vector.shape_cast %17 : vector<2x1x1x16x16xf32> to vector<2x16x16xf32>
    %19 = vector.shape_cast %16 : vector<2x16x16xf32> to vector<2x1x1x16x16xf32>
    tpu.vector_store %arg2[%c0_33, %c1_34, %c0_35, %c0_36, %c0_37], %19 {strides = array<i32>} : memref<2x3x3x16x16xf32, #tpu.memory_space<vmem>>, vector<2x1x1x16x16xf32>,
    %c0_38 = arith.constant 0 : index
    %c1_39 = arith.constant 1 : index
    %c1_40 = arith.constant 1 : index
    %20 = vector.load %arg3[%c0_38, %c1_39, %c1_40] : memref<2x18x18xf32, #tpu.memory_space<vmem>>, vector<2x16x16xf32>
    %c0_41 = arith.constant 0 : index
    %c1_42 = arith.constant 1 : index
    %c1_43 = arith.constant 1 : index
    %c0_44 = arith.constant 0 : index
    %c0_45 = arith.constant 0 : index
    %21 = vector.load %arg2[%c0_41, %c1_42, %c1_43, %c0_44, %c0_45] : memref<2x3x3x16x16xf32, #tpu.memory_space<vmem>>, vector<2x1x1x16x16xf32>
    %22 = vector.shape_cast %21 : vector<2x1x1x16x16xf32> to vector<2x16x16xf32>
    %23 = vector.shape_cast %20 : vector<2x16x16xf32> to vector<2x1x1x16x16xf32>
    tpu.vector_store %arg2[%c0_41, %c1_42, %c1_43, %c0_44, %c0_45], %23 {strides = array<i32>} : memref<2x3x3x16x16xf32, #tpu.memory_space<vmem>>, vector<2x1x1x16x16xf32>,
    %c0_46 = arith.constant 0 : index
    %c1_47 = arith.constant 1 : index
    %c2_48 = arith.constant 2 : index
    %24 = vector.load %arg3[%c0_46, %c1_47, %c2_48] : memref<2x18x18xf32, #tpu.memory_space<vmem>>, vector<2x16x16xf32>
    %c0_49 = arith.constant 0 : index
    %c1_50 = arith.constant 1 : index
    %c2_51 = arith.constant 2 : index
    %c0_52 = arith.constant 0 : index
    %c0_53 = arith.constant 0 : index
    %25 = vector.load %arg2[%c0_49, %c1_50, %c2_51, %c0_52, %c0_53] : memref<2x3x3x16x16xf32, #tpu.memory_space<vmem>>, vector<2x1x1x16x16xf32>
    %26 = vector.shape_cast %25 : vector<2x1x1x16x16xf32> to vector<2x16x16xf32>
    %27 = vector.shape_cast %24 : vector<2x16x16xf32> to vector<2x1x1x16x16xf32>
    tpu.vector_store %arg2[%c0_49, %c1_50, %c2_51, %c0_52, %c0_53], %27 {strides = array<i32>} : memref<2x3x3x16x16xf32, #tpu.memory_space<vmem>>, vector<2x1x1x16x16xf32>,
    %c0_54 = arith.constant 0 : index
    %c2_55 = arith.constant 2 : index
    %c0_56 = arith.constant 0 : index
    %28 = vector.load %arg3[%c0_54, %c2_55, %c0_56] : memref<2x18x18xf32, #tpu.memory_space<vmem>>, vector<2x16x16xf32>
    %c0_57 = arith.constant 0 : index
    %c2_58 = arith.constant 2 : index
    %c0_59 = arith.constant 0 : index
    %c0_60 = arith.constant 0 : index
    %c0_61 = arith.constant 0 : index
    %29 = vector.load %arg2[%c0_57, %c2_58, %c0_59, %c0_60, %c0_61] : memref<2x3x3x16x16xf32, #tpu.memory_space<vmem>>, vector<2x1x1x16x16xf32>
    %30 = vector.shape_cast %29 : vector<2x1x1x16x16xf32> to vector<2x16x16xf32>
    %31 = vector.shape_cast %28 : vector<2x16x16xf32> to vector<2x1x1x16x16xf32>
    tpu.vector_store %arg2[%c0_57, %c2_58, %c0_59, %c0_60, %c0_61], %31 {strides = array<i32>} : memref<2x3x3x16x16xf32, #tpu.memory_space<vmem>>, vector<2x1x1x16x16xf32>,
    %c0_62 = arith.constant 0 : index
    %c2_63 = arith.constant 2 : index
    %c1_64 = arith.constant 1 : index
    %32 = vector.load %arg3[%c0_62, %c2_63, %c1_64] : memref<2x18x18xf32, #tpu.memory_space<vmem>>, vector<2x16x16xf32>
    %c0_65 = arith.constant 0 : index
    %c2_66 = arith.constant 2 : index
    %c1_67 = arith.constant 1 : index
    %c0_68 = arith.constant 0 : index
    %c0_69 = arith.constant 0 : index
    %33 = vector.load %arg2[%c0_65, %c2_66, %c1_67, %c0_68, %c0_69] : memref<2x3x3x16x16xf32, #tpu.memory_space<vmem>>, vector<2x1x1x16x16xf32>
    %34 = vector.shape_cast %33 : vector<2x1x1x16x16xf32> to vector<2x16x16xf32>
    %35 = vector.shape_cast %32 : vector<2x16x16xf32> to vector<2x1x1x16x16xf32>
    tpu.vector_store %arg2[%c0_65, %c2_66, %c1_67, %c0_68, %c0_69], %35 {strides = array<i32>} : memref<2x3x3x16x16xf32, #tpu.memory_space<vmem>>, vector<2x1x1x16x16xf32>,
    %c0_70 = arith.constant 0 : index
    %c2_71 = arith.constant 2 : index
    %c2_72 = arith.constant 2 : index
    %36 = vector.load %arg3[%c0_70, %c2_71, %c2_72] : memref<2x18x18xf32, #tpu.memory_space<vmem>>, vector<2x16x16xf32>
    %c0_73 = arith.constant 0 : index
    %c2_74 = arith.constant 2 : index
    %c2_75 = arith.constant 2 : index
    %c0_76 = arith.constant 0 : index
    %c0_77 = arith.constant 0 : index
    %37 = vector.load %arg2[%c0_73, %c2_74, %c2_75, %c0_76, %c0_77] : memref<2x3x3x16x16xf32, #tpu.memory_space<vmem>>, vector<2x1x1x16x16xf32>
    %38 = vector.shape_cast %37 : vector<2x1x1x16x16xf32> to vector<2x16x16xf32>
    %39 = vector.shape_cast %36 : vector<2x16x16xf32> to vector<2x1x1x16x16xf32>
    tpu.vector_store %arg2[%c0_73, %c2_74, %c2_75, %c0_76, %c0_77], %39 {strides = array<i32>} : memref<2x3x3x16x16xf32, #tpu.memory_space<vmem>>, vector<2x1x1x16x16xf32>,
    return
  }
  func.func @transform_0(%arg0: i32) -> (i32, i32, i32) {
    %c0_i32 = arith.constant 0 : i32
    %c0_i32_0 = arith.constant 0 : i32
    %c0_i32_1 = arith.constant 0 : i32
    return %arg0, %c0_i32, %c0_i32_0 : i32, i32, i32
  }
  func.func @transform_1(%arg0: i32) -> (i32, i32, i32, i32, i32) {
    %c0_i32 = arith.constant 0 : i32
    %c0_i32_0 = arith.constant 0 : i32
    %c0_i32_1 = arith.constant 0 : i32
    %c0_i32_2 = arith.constant 0 : i32
    %c0_i32_3 = arith.constant 0 : i32
    return %arg0, %c0_i32, %c0_i32_0, %c0_i32_1, %c0_i32_2 : i32, i32, i32, i32, i32
  }
}

</mosaic_0001>

<llo_original>
// kernel: tpu_custom_call.1
$region0: #{tpu_custom_call.1}
  #allocation0 [shape = 'u32[]', space=smem, size = 0x4, offset = 0x4, fixed_abs, tag = 'smem constant byte address 0x4 - core index']
  #allocation1 [shape = 'u32[144,128]{1,0:T(1,128)}', space=vmem, size = 0x12000, scoped, tag = 'internal scratch']
  #allocation2 [shape = 'f32[2,18,18]{2,1,0:T(8,128)}', space=vmem, size = 0x6000, scoped, tag = 'scratch operand']
  %s0 = inlined_call_operand.hbm [shape: f32[8,16,16], index: 0, kind: input, shape index: {}]
  %s1 = inlined_call_operand.hbm [shape: f32[8,3,3,16,16], index: 1, kind: output, shape index: {}]
  %s2 = sld [smem:[#allocation0]]
  $region41: #{tpu_custom_call.1} parent=0
    _
  %s4 = ssub.s32 1, %s2
  %s5 = scalar_select 0, %s4, %s2
  $region1: #{tpu_custom_call.1} parent=0
    #allocation3 [shape = 'u8[32768]{0}', space=vmem, size = 0x8000, scoped, tag = 'input window, operand 0']
    #allocation4 [shape = 's32[2]{0}', space=sflag, size = 0x8, scoped, tag = 'scoped memory for tpu_custom_call.1']
    #allocation5 [shape = 's32[2]{0}', space=sflag, size = 0x8, scoped, tag = 'scoped memory for tpu_custom_call.1']
    #allocation6 [shape = 'u8[294912]{0}', space=vmem, size = 0x48000, scoped, tag = 'output window, operand 0']
    %6 = vsyncpa [#allocation4], 0
    %s7 = scalar_lea.sflag [#allocation4], 1
    %8 = vsyncpa %s7, 0
    %9 = vsyncpa [#allocation5], 0
    %s10 = scalar_lea.sflag [#allocation5], 1
    %11 = vsyncpa %s10, 0
    loop: start=0, step=1, limit=6
    $region2: #{tpu_custom_call.1} parent=1 // loop_pre_header
      _
    $region3: #{tpu_custom_call.1} parent=1 // loop_header
      %s13 = sphi 0, %s17
      %p14 = scmp.ge.s32.totalorder %s13, 6
      %s23 = sphi 0, %s25
      %s26 = sphi 0, %s23
      %s27 = sphi 0, %s26
      %s43 = sphi 0, %s27
      %s49 = sphi 0, %s51
      %s52 = sphi 0, %s49
      %s53 = sphi 0, %s52
      %s69 = sphi 0, %s53
    $region4: #{tpu_custom_call.1} parent=1 // loop_header_branch
      %16 = sbr.rel (%p14) target = $region8
    $region5: #{tpu_custom_call.1} parent=1 // loop_body
      %s18 = ssub.s32 %s13, 1
      %s19 = ssub.s32 %s13, 2
      %s20 = sadd.s32 %s13, 1
      %s21 = ssub.s32 %s13, %s20
      %p22 = scmp.eq.s32.totalorder %s21, 0
      %s24 = sadd.s32 %s23, 1
      %s25 = scalar_select %p22, %s23, %s24
      %p28 = pneg %p22
      %p29 = scmp.eq.s32.totalorder %s13, 3
      %p30 = por %p28, %p29
      %p31 = scmp.ne.s32.totalorder %s23, %s26
      %p32 = scmp.eq.s32.totalorder %s13, 0
      %p33 = por %p31, %p32
      %p34 = scmp.ne.s32.totalorder %s23, %s26
      %p35 = scmp.eq.s32.totalorder %s18, 3
      %p36 = por %p34, %p35
      %p37 = scmp.ne.s32.totalorder %s26, %s27
      %p38 = scmp.eq.s32.totalorder %s18, 0
      %p39 = por %p37, %p38
      %p40 = scmp.ne.s32.totalorder %s26, %s27
      %p41 = scmp.eq.s32.totalorder %s19, 3
      %p42 = por %p40, %p41
      %p44 = scmp.ne.s32.totalorder %s27, %s43
      %p45 = scmp.eq.s32.totalorder %s19, 0
      %p46 = por %p44, %p45
      %s47 = ssub.s32 %s13, %s20
      %p48 = scmp.eq.s32.totalorder %s47, 0
      %s50 = sadd.s32 %s49, 1
      %s51 = scalar_select %p48, %s49, %s50
      %p54 = pneg %p48
      %p55 = scmp.eq.s32.totalorder %s13, 3
      %p56 = por %p54, %p55
      %p57 = scmp.ne.s32.totalorder %s49, %s52
      %p58 = scmp.eq.s32.totalorder %s13, 0
      %p59 = por %p57, %p58
      %p60 = scmp.ne.s32.totalorder %s49, %s52
      %p61 = scmp.eq.s32.totalorder %s18, 3
      %p62 = por %p60, %p61
      %p63 = scmp.ne.s32.totalorder %s52, %s53
      %p64 = scmp.eq.s32.totalorder %s18, 0
      %p65 = por %p63, %p64
      %p66 = scmp.ne.s32.totalorder %s52, %s53
      %p67 = scmp.eq.s32.totalorder %s19, 3
      %p68 = por %p66, %p67
      %p70 = scmp.ne.s32.totalorder %s53, %s69
      %p71 = scmp.eq.s32.totalorder %s19, 0
      %p72 = por %p70, %p71
      %p73 = scmp.le.s32.totalorder 1, %s13
      %p74 = scmp.lt.s32.totalorder %s13, 5
      %p75 = pnand %p73, %p74
      %p76 = pneg %p75
      // Predicated region
      $region9: #{tpu_custom_call.1} parent=5 // pred_check
        _
      $region10: #{tpu_custom_call.1} parent=5 // pred_check_branch
        %78 = sbr.rel (%p75) target = $region12
      $region11: #{tpu_custom_call.1} parent=5 // pred_region
        %s79 = ssub.s32 %s13, 1
      $region12: #{tpu_custom_call.1} parent=5 // pred_fallthru
        _
      %p80 = scmp.lt.s32.totalorder %s13, 4
      // Predicated region
      $region13: #{tpu_custom_call.1} parent=5 // pred_check
        %p81 = pneg %p80
      $region14: #{tpu_custom_call.1} parent=5 // pred_check_branch
        %83 = sbr.rel (%p81) target = $region16
      $region15: #{tpu_custom_call.1} parent=5 // pred_region
        // Predicated region
        $region17: #{tpu_custom_call.1} parent=15 // pred_check
          %p84 = pneg %p33
        $region18: #{tpu_custom_call.1} parent=15 // pred_check_branch
          %86 = sbr.rel (%p84) target = $region20
        $region19: #{tpu_custom_call.1} parent=15 // pred_region
          %s87 = sand.u32 %s23, 1
          %s88 = scalar_lea.sflag [#allocation4], %s87
          %s89 = sand.u32 %s23, 1
          %s90 = smul.addr %s89, 32
          %s91 = scalar_lea.vmem [#allocation3], %s90
          %s92 = smul.u32 2, %s13
          %s94 = ssub.s32 512, 512
          %95 = vsyncadd %s88, %s94
          %s96 = smul.addr %s92, 2
          %s97 = smul.addr %s96, 128
          %s98 = scalar_lea.hbm %s0, %s97
          %s99 = sshll.u32 %s91, 4
          %s100 = int_to_ptr.vmem [resolvable:$true] %s99
          %105 = dma.hbm_to_vmem [thread:$0]  %s98, 512, %s100, %s88, 128, 128, 8
        $region20: #{tpu_custom_call.1} parent=15 // pred_fallthru
          _
      $region16: #{tpu_custom_call.1} parent=5 // pred_fallthru
        _
      %p106 = scmp.le.s32.totalorder 1, %s13
      %p107 = scmp.lt.s32.totalorder %s13, 5
      %p108 = pnand %p106, %p107
      %p109 = pneg %p108
      // Predicated region
      $region21: #{tpu_custom_call.1} parent=5 // pred_check
        _
      $region22: #{tpu_custom_call.1} parent=5 // pred_check_branch
        %111 = sbr.rel (%p108) target = $region24
      $region23: #{tpu_custom_call.1} parent=5 // pred_region
        %s112 = ssub.s32 %s13, 1
        %s113 = sand.u32 %s26, 1
        %s114 = scalar_lea.sflag [#allocation4], %s113
        %s115 = sand.u32 %s26, 1
        %s116 = smul.addr %s115, 32
        %s117 = scalar_lea.vmem [#allocation3], %s116
        // Predicated region
        $region25: #{tpu_custom_call.1} parent=23 // pred_check
          %p118 = pneg %p39
        $region26: #{tpu_custom_call.1} parent=23 // pred_check_branch
          %120 = sbr.rel (%p118) target = $region28
        $region27: #{tpu_custom_call.1} parent=23 // pred_region
          %121 = dma.done %s114, 512
        $region28: #{tpu_custom_call.1} parent=23 // pred_fallthru
          _
        %s122 = sand.u32 %s26, 1
        %s123 = scalar_lea.sflag [#allocation4], %s122
        %s124 = sand.u32 %s26, 1
        %s125 = smul.addr %s124, 32
        %s126 = scalar_lea.vmem [#allocation3], %s125
        %p127 = pneg %p39
        %p128 = pneg %p36
        %p129 = pneg %p65
        %p130 = pneg %p62
        %s131 = sand.u32 %s52, 1
        %s132 = scalar_lea.sflag [#allocation5], %s131
        %s133 = sand.u32 %s52, 1
        %s134 = smul.addr %s133, 288
        %s135 = scalar_lea.vmem [#allocation6], %s134
        %s136 = smul.u32 2, %s18
        %s137 = smul.u32 2, %s18
        %vm138 = vcmask 146432
        %139 = vst.msk [vmem:[#allocation2] sm:$0xff] %vm138, 0.0
        %140 = vst.msk [vmem:[#allocation2 + $0x8] sm:$0xff] %vm138, 0.0
        %vm141 = vcmask 140288
        %142 = vst.msk [vmem:[#allocation2 + $0x10] sm:$0x3] %vm141, 0.0
        %143 = vst.msk [vmem:[#allocation2 + $0x18] sm:$0xff] %vm138, 0.0
        %144 = vst.msk [vmem:[#allocation2 + $0x20] sm:$0xff] %vm138, 0.0
        %145 = vst.msk [vmem:[#allocation2 + $0x28] sm:$0x3] %vm141, 0.0
        %v146 = vld [vmem:[%s117] sm:$0xff]
        %v147 = vld [vmem:[%s117 + $0x8] sm:$0xff]
        %v148 = vld [vmem:[%s117 + $0x10] sm:$0xff]
        %v149 = vld [vmem:[%s117 + $0x18] sm:$0xff]
        %154 = vrot.lane.b32.xlu0 %v146, 1
        %v155 = vpop.permute.xlu0 %154
        %156 = vrot.lane.b32.xlu0 %v147, 1
        %v157 = vpop.permute.xlu0 %156
        %158 = vrot.lane.b32.xlu0 %v148, 1
        %v159 = vpop.permute.xlu0 %158
        %160 = vrot.lane.b32.xlu0 %v149, 1
        %v161 = vpop.permute.xlu0 %160
        %vm166 = vcmask 138248
        %167 = vst.msk [vmem:[#allocation2 + $0x1] sm:$0xff] %vm166, %v155
        %168 = vst.msk [vmem:[#allocation2 + $0x9] sm:$0xff] %vm166, %v157
        %169 = vst.msk [vmem:[#allocation2 + $0x19] sm:$0xff] %vm166, %v159
        %170 = vst.msk [vmem:[#allocation2 + $0x21] sm:$0xff] %vm166, %v161
        %v171 = vld [vmem:[#allocation2] sm:$0xff]
        %v172 = vld [vmem:[#allocation2 + $0x8] sm:$0xff]
        %v173 = vld [vmem:[#allocation2 + $0x18] sm:$0xff]
        %v174 = vld [vmem:[#allocation2 + $0x20] sm:$0xff]
        %vm175 = vcmask 130048
        %176 = vst.msk [vmem:[%s135] sm:$0xff] %vm175, %v171
        %177 = vst.msk [vmem:[%s135 + $0x8] sm:$0xff] %vm175, %v172
        %178 = vst.msk [vmem:[%s135 + $0x90] sm:$0xff] %vm175, %v173
        %179 = vst.msk [vmem:[%s135 + $0x98] sm:$0xff] %vm175, %v174
        %v180 = vld [vmem:[#allocation2] sm:$0xff]
        %v181 = vld [vmem:[#allocation2 + $0x8] sm:$0xff]
        %v182 = vld [vmem:[#allocation2 + $0x18] sm:$0xff]
        %v183 = vld [vmem:[#allocation2 + $0x20] sm:$0xff]
        %188 = vrot.lane.b32.xlu0 %v180, 127
        %v189 = vpop.permute.xlu0 %188
        %190 = vrot.lane.b32.xlu0 %v181, 127
        %v191 = vpop.permute.xlu0 %190
        %192 = vrot.lane.b32.xlu0 %v182, 127
        %v193 = vpop.permute.xlu0 %192
        %194 = vrot.lane.b32.xlu0 %v183, 127
        %v195 = vpop.permute.xlu0 %194
        %s200 = scalar_lea.vmem %s135, 16 [#allocation6]
        %201 = vst.msk [vmem:[%s200] sm:$0xff] %vm175, %v189
        %202 = vst.msk [vmem:[%s200 + $0x8] sm:$0xff] %vm175, %v191
        %203 = vst.msk [vmem:[%s200 + $0x90] sm:$0xff] %vm175, %v193
        %204 = vst.msk [vmem:[%s200 + $0x98] sm:$0xff] %vm175, %v195
        %v205 = vld [vmem:[#allocation2] sm:$0xff]
        %v206 = vld [vmem:[#allocation2 + $0x8] sm:$0xff]
        %v207 = vld [vmem:[#allocation2 + $0x18] sm:$0xff]
        %v208 = vld [vmem:[#allocation2 + $0x20] sm:$0xff]
        %213 = vrot.lane.b32.xlu0 %v205, 126
        %v214 = vpop.permute.xlu0 %213
        %215 = vrot.lane.b32.xlu0 %v206, 126
        %v216 = vpop.permute.xlu0 %215
        %217 = vrot.lane.b32.xlu0 %v207, 126
        %v218 = vpop.permute.xlu0 %217
        %219 = vrot.lane.b32.xlu0 %v208, 126
        %v220 = vpop.permute.xlu0 %219
        %s225 = scalar_lea.vmem %s135, 32 [#allocation6]
        %226 = vst.msk [vmem:[%s225] sm:$0xff] %vm175, %v214
        %227 = vst.msk [vmem:[%s225 + $0x8] sm:$0xff] %vm175, %v216
        %228 = vst.msk [vmem:[%s225 + $0x90] sm:$0xff] %vm175, %v218
        %229 = vst.msk [vmem:[%s225 + $0x98] sm:$0xff] %vm175, %v220
        %v230 = vld [vmem:[#allocation2 + $0x1] sm:$0xff]
        %v231 = vld [vmem:[#allocation2 + $0x9] sm:$0xff]
        %v232 = vld [vmem:[#allocation2 + $0x19] sm:$0xff]
        %v233 = vld [vmem:[#allocation2 + $0x21] sm:$0xff]
        %s234 = scalar_lea.vmem %s135, 48 [#allocation6]
        %235 = vst.msk [vmem:[%s234] sm:$0xff] %vm175, %v230
        %236 = vst.msk [vmem:[%s234 + $0x8] sm:$0xff] %vm175, %v231
        %237 = vst.msk [vmem:[%s234 + $0x90] sm:$0xff] %vm175, %v232
        %238 = vst.msk [vmem:[%s234 + $0x98] sm:$0xff] %vm175, %v233
        %v239 = vld [vmem:[#allocation2 + $0x1] sm:$0xff]
        %v240 = vld [vmem:[#allocation2 + $0x9] sm:$0xff]
        %v241 = vld [vmem:[#allocation2 + $0x19] sm:$0xff]
        %v242 = vld [vmem:[#allocation2 + $0x21] sm:$0xff]
        %247 = vrot.lane.b32.xlu0 %v239, 127
        %v248 = vpop.permute.xlu0 %247
        %249 = vrot.lane.b32.xlu0 %v240, 127
        %v250 = vpop.permute.xlu0 %249
        %251 = vrot.lane.b32.xlu0 %v241, 127
        %v252 = vpop.permute.xlu0 %251
        %253 = vrot.lane.b32.xlu0 %v242, 127
        %v254 = vpop.permute.xlu0 %253
        %s259 = scalar_lea.vmem %s135, 64 [#allocation6]
        %260 = vst.msk [vmem:[%s259] sm:$0xff] %vm175, %v248
        %261 = vst.msk [vmem:[%s259 + $0x8] sm:$0xff] %vm175, %v250
        %262 = vst.msk [vmem:[%s259 + $0x90] sm:$0xff] %vm175, %v252
        %263 = vst.msk [vmem:[%s259 + $0x98] sm:$0xff] %vm175, %v254
        %v264 = vld [vmem:[#allocation2 + $0x1] sm:$0xff]
        %v265 = vld [vmem:[#allocation2 + $0x9] sm:$0xff]
        %v266 = vld [vmem:[#allocation2 + $0x19] sm:$0xff]
        %v267 = vld [vmem:[#allocation2 + $0x21] sm:$0xff]
        %272 = vrot.lane.b32.xlu0 %v264, 126
        %v273 = vpop.permute.xlu0 %272
        %274 = vrot.lane.b32.xlu0 %v265, 126
        %v275 = vpop.permute.xlu0 %274
        %276 = vrot.lane.b32.xlu0 %v266, 126
        %v277 = vpop.permute.xlu0 %276
        %278 = vrot.lane.b32.xlu0 %v267, 126
        %v279 = vpop.permute.xlu0 %278
        %s284 = scalar_lea.vmem %s135, 80 [#allocation6]
        %285 = vst.msk [vmem:[%s284] sm:$0xff] %vm175, %v273
        %286 = vst.msk [vmem:[%s284 + $0x8] sm:$0xff] %vm175, %v275
        %287 = vst.msk [vmem:[%s284 + $0x90] sm:$0xff] %vm175, %v277
        %288 = vst.msk [vmem:[%s284 + $0x98] sm:$0xff] %vm175, %v279
        %v289 = vld [vmem:[#allocation2 + $0x2] sm:$0xff]
        %v290 = vld [vmem:[#allocation2 + $0xa] sm:$0xff]
        %v291 = vld [vmem:[#allocation2 + $0x1a] sm:$0xff]
        %v292 = vld [vmem:[#allocation2 + $0x22] sm:$0xff]
        %s293 = scalar_lea.vmem %s135, 96 [#allocation6]
        %294 = vst.msk [vmem:[%s293] sm:$0xff] %vm175, %v289
        %295 = vst.msk [vmem:[%s293 + $0x8] sm:$0xff] %vm175, %v290
        %296 = vst.msk [vmem:[%s293 + $0x90] sm:$0xff] %vm175, %v291
        %297 = vst.msk [vmem:[%s293 + $0x98] sm:$0xff] %vm175, %v292
        %v298 = vld [vmem:[#allocation2 + $0x2] sm:$0xff]
        %v299 = vld [vmem:[#allocation2 + $0xa] sm:$0xff]
        %v300 = vld [vmem:[#allocation2 + $0x1a] sm:$0xff]
        %v301 = vld [vmem:[#allocation2 + $0x22] sm:$0xff]
        %306 = vrot.lane.b32.xlu0 %v298, 127
        %v307 = vpop.permute.xlu0 %306
        %308 = vrot.lane.b32.xlu0 %v299, 127
        %v309 = vpop.permute.xlu0 %308
        %310 = vrot.lane.b32.xlu0 %v300, 127
        %v311 = vpop.permute.xlu0 %310
        %312 = vrot.lane.b32.xlu0 %v301, 127
        %v313 = vpop.permute.xlu0 %312
        %s318 = scalar_lea.vmem %s135, 112 [#allocation6]
        %319 = vst.msk [vmem:[%s318] sm:$0xff] %vm175, %v307
        %320 = vst.msk [vmem:[%s318 + $0x8] sm:$0xff] %vm175, %v309
        %321 = vst.msk [vmem:[%s318 + $0x90] sm:$0xff] %vm175, %v311
        %322 = vst.msk [vmem:[%s318 + $0x98] sm:$0xff] %vm175, %v313
        %v323 = vld [vmem:[#allocation2 + $0x2] sm:$0xff]
        %v324 = vld [vmem:[#allocation2 + $0xa] sm:$0xff]
        %v325 = vld [vmem:[#allocation2 + $0x1a] sm:$0xff]
        %v326 = vld [vmem:[#allocation2 + $0x22] sm:$0xff]
        %331 = vrot.lane.b32.xlu0 %v323, 126
        %v332 = vpop.permute.xlu0 %331
        %333 = vrot.lane.b32.xlu0 %v324, 126
        %v334 = vpop.permute.xlu0 %333
        %335 = vrot.lane.b32.xlu0 %v325, 126
        %v336 = vpop.permute.xlu0 %335
        %337 = vrot.lane.b32.xlu0 %v326, 126
        %v338 = vpop.permute.xlu0 %337
        %s343 = scalar_lea.vmem %s135, 128 [#allocation6]
        %344 = vst.msk [vmem:[%s343] sm:$0xff] %vm175, %v332
        %345 = vst.msk [vmem:[%s343 + $0x8] sm:$0xff] %vm175, %v334
        %346 = vst.msk [vmem:[%s343 + $0x90] sm:$0xff] %vm175, %v336
        %347 = vst.msk [vmem:[%s343 + $0x98] sm:$0xff] %vm175, %v338
        %s348 = sand.u32 %s52, 1
        %s349 = scalar_lea.sflag [#allocation5], %s348
        %s350 = sand.u32 %s52, 1
        %s351 = smul.addr %s350, 288
        %s352 = scalar_lea.vmem [#allocation6], %s351
        // Predicated region
        $region29: #{tpu_custom_call.1} parent=23 // pred_check
          %p353 = pneg %p62
        $region30: #{tpu_custom_call.1} parent=23 // pred_check_branch
          %355 = sbr.rel (%p353) target = $region32
        $region31: #{tpu_custom_call.1} parent=23 // pred_region
          %s356 = smul.u32 2, %s18
          %s358 = ssub.s32 4608, 4608
          %359 = vsyncadd %s349, %s358
          %s360 = smul.addr %s356, 18
          %s361 = smul.addr %s360, 128
          %s362 = scalar_lea.hbm %s1, %s361
          %s363 = sshll.u32 %s352, 4
          %s364 = int_to_ptr.vmem [resolvable:$true] %s363
          %369 = dma.vmem_to_hbm [thread:$0]  %s364, 4608, %s362, %s349, 128, 128, 8
        $region32: #{tpu_custom_call.1} parent=23 // pred_fallthru
          _
      $region24: #{tpu_custom_call.1} parent=5 // pred_fallthru
        _
      %p370 = scmp.le.s32.totalorder 2, %s13
      // Predicated region
      $region33: #{tpu_custom_call.1} parent=5 // pred_check
        %p371 = pneg %p370
      $region34: #{tpu_custom_call.1} parent=5 // pred_check_branch
        %373 = sbr.rel (%p371) target = $region36
      $region35: #{tpu_custom_call.1} parent=5 // pred_region
        %s374 = ssub.s32 %s13, 2
        // Predicated region
        $region37: #{tpu_custom_call.1} parent=35 // pred_check
          %p375 = pneg %p68
        $region38: #{tpu_custom_call.1} parent=35 // pred_check_branch
          %377 = sbr.rel (%p375) target = $region40
        $region39: #{tpu_custom_call.1} parent=35 // pred_region
          %s378 = sand.u32 %s53, 1
          %s379 = scalar_lea.sflag [#allocation5], %s378
          %s380 = sand.u32 %s53, 1
          %s381 = smul.addr %s380, 288
          %s382 = scalar_lea.vmem [#allocation6], %s381
          %383 = dma.done %s379, 4608
        $region40: #{tpu_custom_call.1} parent=35 // pred_fallthru
          _
      $region36: #{tpu_custom_call.1} parent=5 // pred_fallthru
        _
    $region6: #{tpu_custom_call.1} parent=1 // loop_footer
      %s17 = sadd.s32 1, %s13
    $region7: #{tpu_custom_call.1} parent=1 // loop_footer_branch
      %12 = sbr.rel target = $region3
    $region8: #{tpu_custom_call.1} parent=1 // loop_exit
      _
    %384 = vsyncpa [#allocation4], 1
    %s385 = scalar_lea.sflag [#allocation4], 1
    %386 = vsyncpa %s385, 1
    %387 = vsyncpa [#allocation5], 1
    %s388 = scalar_lea.sflag [#allocation5], 1
    %389 = vsyncpa %s388, 1

</llo_original>
